<compile_context>
chip_gen: v7x
topology: tpu7x:2x2x1
jax: 0.10.0
libtpu: 0.0.40
codegen_flags: <defaults>
</compile_context>

<pallas_src>
import jax
import jax.numpy as jnp
from jax.experimental import pallas as pl
from jax.experimental.pallas import tpu as pltpu


def _inverse_evd_kernel(u_ref, y_ref, o_ref):
    """One (tb, tn, tk) output tile of y_est = U^T @ y_wave (f32 output).

    u_ref: (tb, tm, tn)   M (contraction) is the sublane dim
    y_ref: (tb, tm, tk)
    o_ref: (tb, tn, tk)   f32; doubles as the accumulator across the M axis
    """
    m_idx = pl.program_id(3)

    @pl.when(m_idx == 0)
    def _():
        o_ref[...] = jnp.zeros_like(o_ref)

    # bmn,bmk->bnk : contract M (dim 1) of both operands, batch over dim 0.
    # Transposed-LHS layout is fed to the MXU directly (no materialized
    # transpose, no XLU traffic).
    o_ref[...] += jax.lax.dot_general(
        u_ref[...],
        y_ref[...],
        dimension_numbers=(((1,), (1,)), ((0,), (0,))),
        preferred_element_type=jnp.float32,
    )


def _inverse_evd_kernel_acc(u_ref, y_ref, o_ref, acc_ref):
    """Same as above, but with an f32 scratch accumulator (non-f32 output)."""
    m_idx = pl.program_id(3)

    @pl.when(m_idx == 0)
    def _():
        acc_ref[...] = jnp.zeros_like(acc_ref)

    acc_ref[...] += jax.lax.dot_general(
        u_ref[...],
        y_ref[...],
        dimension_numbers=(((1,), (1,)), ((0,), (0,))),
        preferred_element_type=jnp.float32,
    )

    @pl.when(m_idx == pl.num_programs(3) - 1)
    def _():
        o_ref[...] = acc_ref[...].astype(o_ref.dtype)


def _largest_divisor_tile(dim: int, granule: int, cap: int) -> int:
    """Largest multiple of `granule` that divides `dim`, capped at `cap`.

    Falls back to the full extent when `dim` is not granule-aligned (a block
    equal to the full array dim needs no (8,128) alignment).
    """
    if dim % granule != 0:
        return dim
    cap = max(granule, min(cap, dim))
    best = granule
    t = granule
    while t <= cap:
        if dim % t == 0:
            best = t
        t += granule
    return best


def inverse_evd(U: jax.Array, y_wave: jax.Array) -> jax.Array:
    """Pallas equivalent of InverseEVD.forward.

    U: (B, M, N), y_wave: (B, M, K)  ->  (B, N, K)
    """
    B, M, N = U.shape
    B2, M2, K = y_wave.shape
    assert B == B2 and M == M2, "U and y_wave must share batch and row dims"

    # dot_general needs matching operand dtypes; promote once in the wrapper.
    compute_dtype = jnp.promote_types(U.dtype, y_wave.dtype)
    out_dtype = compute_dtype
    if U.dtype != compute_dtype:
        U = U.astype(compute_dtype)
    if y_wave.dtype != compute_dtype:
        y_wave = y_wave.astype(compute_dtype)

    in_itemsize = jnp.dtype(compute_dtype).itemsize
    out_itemsize = jnp.dtype(out_dtype).itemsize

    # Sublane granule of the contraction (M) dim depends on dtype packing:
    # 32-bit -> 8, 16-bit -> 16, 8-bit -> 32 rows per vreg.
    m_granule = {4: 8, 2: 16, 1: 32}.get(in_itemsize, 8)

    # Large, lane-dense tiles.  tk prefers full K (no re-streaming of the U
    # strip); tm prefers full M (no reduction grid axis); lane dims (tn, tk)
    # are multiples of 128 or the full extent.
    tn = _largest_divisor_tile(N, 128, 512)
    tk = _largest_divisor_tile(K, 128, 1024)
    tm = _largest_divisor_tile(M, m_granule, 1024)

    use_scratch = out_dtype != jnp.float32

    def _footprint(tb: int) -> int:
        f = 2 * tb * tm * tn * in_itemsize          # U tile, double-buffered
        f += 2 * tb * tm * tk * in_itemsize         # Y tile, double-buffered
        f += 2 * tb * tn * tk * out_itemsize        # out tile, double-buffered
        if use_scratch:
            f += tb * tn * tk * 4                   # f32 accumulator
        return f

    # Conservative working-set budget that fits every TPU generation (v7x has
    # 64 MiB physical VMEM per TensorCore); explicit limit gives headroom.
    VMEM_BUDGET = 32 * 1024 * 1024
    VMEM_LIMIT = 48 * 1024 * 1024

    # Fold as many batch elements per grid step as the budget allows
    # (amortizes per-step overhead for small per-batch matrices).
    tb = 1
    for cand in range(B, 0, -1):
        if B % cand == 0 and _footprint(cand) <= VMEM_BUDGET:
            tb = cand
            break

    grid = (B // tb, N // tn, K // tk, M // tm)  # reduction (M) axis last

    kernel = _inverse_evd_kernel_acc if use_scratch else _inverse_evd_kernel
    scratch = [pltpu.VMEM((tb, tn, tk), jnp.float32)] if use_scratch else []

    cost = pl.CostEstimate(
        flops=2 * B * M * N * K,
        transcendentals=0,
        bytes_accessed=(B * M * N * in_itemsize
                        + B * M * K * in_itemsize
                        + B * N * K * out_itemsize),
    )

    return pl.pallas_call(
        kernel,
        out_shape=jax.ShapeDtypeStruct((B, N, K), out_dtype),
        grid=grid,
        in_specs=[
            pl.BlockSpec((tb, tm, tn), lambda b, n, k, m: (b, m, n)),
            pl.BlockSpec((tb, tm, tk), lambda b, n, k, m: (b, m, k)),
        ],
        out_specs=pl.BlockSpec((tb, tn, tk), lambda b, n, k, m: (b, n, k)),
        scratch_shapes=scratch,
        compiler_params=pltpu.CompilerParams(
            dimension_semantics=("parallel", "parallel", "parallel", "arbitrary"),
            vmem_limit_bytes=VMEM_LIMIT,
        ),
        cost_estimate=cost,
    )(U, y_wave)


if __name__ == "__main__":
    key = jax.random.PRNGKey(0)
    ku, ky = jax.random.split(key)

    # Small, tile-friendly shapes: U is the (n x n) eigenvector matrix per
    # batch element, y_wave a stack of measurement vectors.
    B, n, k = 4, 128, 128
    U = jax.random.normal(ku, (B, n, n), dtype=jnp.float32)
    y_wave = jax.random.normal(ky, (B, n, k), dtype=jnp.float32)

    out = inverse_evd(U, y_wave)
    out = jax.block_until_ready(out)

    # Reference: torch.matmul(U.transpose(2, 1), y_wave)
    ref = jnp.einsum(
        "bmn,bmk->bnk", U, y_wave, precision=jax.lax.Precision.HIGHEST
    )

    assert out.shape == (B, n, k)
    assert out.dtype == U.dtype
    rel_err = float(jnp.max(jnp.abs(out - ref)) / jnp.max(jnp.abs(ref)))
    assert rel_err < 1e-2, f"max relative error too large: {rel_err}"

    print("KERNEL_OK")
</pallas_src>

<mosaic_0001>
module attributes {stable_mosaic.version = 11 : i64} {
  func.func @_inverse_evd_kernel(%arg0: i32, %arg1: i32, %arg2: i32, %arg3: i32, %arg4: memref<4x128x128xf32, #tpu.memory_space<vmem>>, %arg5: memref<4x128x128xf32, #tpu.memory_space<vmem>>, %arg6: memref<4x128x128xf32, #tpu.memory_space<vmem>>) attributes {dimension_semantics = [#tpu.dimension_semantics<parallel>, #tpu.dimension_semantics<parallel>, #tpu.dimension_semantics<parallel>, #tpu.dimension_semantics<arbitrary>], iteration_bounds = array<i64: 1, 1, 1, 1>, scalar_prefetch = 0 : i64, scratch_operands = 0 : i64, tpu.core_type = #tpu.core_type<tc>, window_params = [{transform_indices = @transform_0, window_bounds = array<i64: 4, 128, 128>}, {transform_indices = @transform_1, window_bounds = array<i64: 4, 128, 128>}, {transform_indices = @transform_2, window_bounds = array<i64: 4, 128, 128>}]} {
    %c0_i32 = arith.constant 0 : i32
    %0 = arith.cmpi eq, %arg3, %c0_i32 : i32
    %1 = arith.extui %0 : i1 to i32
    %c0_i32_0 = arith.constant 0 : i32
    %2 = arith.cmpi ne, %1, %c0_i32_0 : i32
    scf.if %2 {
      %cst_12 = arith.constant 0.000000e+00 : f32
      %9 = vector.broadcast %cst_12 : f32 to vector<4x128x128xf32>
      %c0_13 = arith.constant 0 : index
      %c0_14 = arith.constant 0 : index
      %c0_15 = arith.constant 0 : index
      %10 = vector.load %arg6[%c0_13, %c0_14, %c0_15] : memref<4x128x128xf32, #tpu.memory_space<vmem>>, vector<4x128x128xf32>
      tpu.vector_store %arg6[%c0_13, %c0_14, %c0_15], %9 {strides = array<i32>} : memref<4x128x128xf32, #tpu.memory_space<vmem>>, vector<4x128x128xf32>,
    } else {
    }
    %c0 = arith.constant 0 : index
    %c0_1 = arith.constant 0 : index
    %c0_2 = arith.constant 0 : index
    %3 = vector.load %arg6[%c0, %c0_1, %c0_2] : memref<4x128x128xf32, #tpu.memory_space<vmem>>, vector<4x128x128xf32>
    %c0_3 = arith.constant 0 : index
    %c0_4 = arith.constant 0 : index
    %c0_5 = arith.constant 0 : index
    %4 = vector.load %arg4[%c0_3, %c0_4, %c0_5] : memref<4x128x128xf32, #tpu.memory_space<vmem>>, vector<4x128x128xf32>
    %c0_6 = arith.constant 0 : index
    %c0_7 = arith.constant 0 : index
    %c0_8 = arith.constant 0 : index
    %5 = vector.load %arg5[%c0_6, %c0_7, %c0_8] : memref<4x128x128xf32, #tpu.memory_space<vmem>>, vector<4x128x128xf32>
    %cst = arith.constant dense<0.000000e+00> : vector<4x128x128xf32>
    %6 = tpu.matmul %4, %5, %cst {dimension_numbers = #tpu.dot_dimension_numbers<[1], [1], [2], [2], [0, 0, 0, 2, 1, 2], [0], [0]>} : vector<4x128x128xf32>, vector<4x128x128xf32>, vector<4x128x128xf32> -> vector<4x128x128xf32>
    %7 = arith.addf %3, %6 : vector<4x128x128xf32>
    %c0_9 = arith.constant 0 : index
    %c0_10 = arith.constant 0 : index
    %c0_11 = arith.constant 0 : index
    %8 = vector.load %arg6[%c0_9, %c0_10, %c0_11] : memref<4x128x128xf32, #tpu.memory_space<vmem>>, vector<4x128x128xf32>
    tpu.vector_store %arg6[%c0_9, %c0_10, %c0_11], %7 {strides = array<i32>} : memref<4x128x128xf32, #tpu.memory_space<vmem>>, vector<4x128x128xf32>,
    return
  }
  func.func @transform_0(%arg0: i32, %arg1: i32, %arg2: i32, %arg3: i32) -> (i32, i32, i32) {
    %c0_i32 = arith.constant 0 : i32
    return %arg0, %arg3, %arg1 : i32, i32, i32
  }
  func.func @transform_1(%arg0: i32, %arg1: i32, %arg2: i32, %arg3: i32) -> (i32, i32, i32) {
    %c0_i32 = arith.constant 0 : i32
    return %arg0, %arg3, %arg2 : i32, i32, i32
  }
  func.func @transform_2(%arg0: i32, %arg1: i32, %arg2: i32, %arg3: i32) -> (i32, i32, i32) {
    %c0_i32 = arith.constant 0 : i32
    return %arg0, %arg1, %arg2 : i32, i32, i32
  }
}

</mosaic_0001>

<llo_original>
// kernel: tpu_custom_call.1
$region0: #{tpu_custom_call.1}
  #allocation0 [shape = 'u32[]', space=smem, size = 0x4, offset = 0x4, fixed_abs, tag = 'smem constant byte address 0x4 - core index']
  #allocation1 [shape = 'u32[144,128]{1,0:T(1,128)}', space=vmem, size = 0x12000, scoped, tag = 'internal scratch']
  %s0 = inlined_call_operand.hbm [shape: f32[4,128,128], index: 0, kind: input, shape index: {}]
  %s1 = inlined_call_operand.hbm [shape: f32[4,128,128], index: 1, kind: input, shape index: {}]
  %s2 = inlined_call_operand.hbm [shape: f32[4,128,128], index: 2, kind: output, shape index: {}]
  %s3 = sld [smem:[#allocation0]]
  $region30: #{tpu_custom_call.1} parent=0
    _
  %s5 = ssub.s32 1, %s3
  %s6 = scalar_select 0, %s5, %s3
  $region1: #{tpu_custom_call.1} parent=0
    #allocation2 [shape = 'u8[262144]{0}', space=vmem, size = 0x40000, scoped, tag = 'input window, operand 0, single buffered']
    #allocation3 [shape = 's32[1]{0}', space=sflag, size = 0x4, scoped, tag = 'scoped memory for tpu_custom_call.1']
    #allocation4 [shape = 's32[1]{0}', space=sflag, size = 0x4, scoped, tag = 'scoped memory for tpu_custom_call.1']
    #allocation5 [shape = 'u8[262144]{0}', space=vmem, size = 0x40000, scoped, tag = 'input window, operand 1, single buffered']
    #allocation6 [shape = 's32[1]{0}', space=sflag, size = 0x4, scoped, tag = 'scoped memory for tpu_custom_call.1']
    #allocation7 [shape = 'u8[262144]{0}', space=vmem, size = 0x40000, scoped, tag = 'output window, operand 0, single buffered']
    %7 = vsyncpa [#allocation3], 0
    %8 = vsyncpa [#allocation6], 0
    %9 = vsyncpa [#allocation4], 0
    // Predicated region
    $region2: #{tpu_custom_call.1} parent=1 // pred_check
      _
    $region3: #{tpu_custom_call.1} parent=1 // pred_check_branch
      %11 = sbr.rel (0) target = $region5
    $region4: #{tpu_custom_call.1} parent=1 // pred_region
      %s13 = ssub.s32 8192, 8192
      %14 = vsyncadd [#allocation3], %s13
      %s15 = sshll.u32 [#allocation2], 4
      %s16 = int_to_ptr.vmem [resolvable:$true] %s15
      %21 = dma.hbm_to_vmem [thread:$0]  %s0, 8192, %s16, [#allocation3], 128, 128, 8
    $region5: #{tpu_custom_call.1} parent=1 // pred_fallthru
      _
    // Predicated region
    $region6: #{tpu_custom_call.1} parent=1 // pred_check
      _
    $region7: #{tpu_custom_call.1} parent=1 // pred_check_branch
      %23 = sbr.rel (0) target = $region9
    $region8: #{tpu_custom_call.1} parent=1 // pred_region
      %s25 = ssub.s32 8192, 8192
      %26 = vsyncadd [#allocation6], %s25
      %s27 = sshll.u32 [#allocation5], 4
      %s28 = int_to_ptr.vmem [resolvable:$true] %s27
      %33 = dma.hbm_to_vmem [thread:$0]  %s1, 8192, %s28, [#allocation6], 128, 128, 8
    $region9: #{tpu_custom_call.1} parent=1 // pred_fallthru
      _
    // Predicated region
    $region10: #{tpu_custom_call.1} parent=1 // pred_check
      _
    $region11: #{tpu_custom_call.1} parent=1 // pred_check_branch
      %35 = sbr.rel (0) target = $region13
    $region12: #{tpu_custom_call.1} parent=1 // pred_region
      %36 = dma.done [#allocation3], 8192
    $region13: #{tpu_custom_call.1} parent=1 // pred_fallthru
      _
    // Predicated region
    $region14: #{tpu_custom_call.1} parent=1 // pred_check
      _
    $region15: #{tpu_custom_call.1} parent=1 // pred_check_branch
      %38 = sbr.rel (0) target = $region17
    $region16: #{tpu_custom_call.1} parent=1 // pred_region
      %39 = dma.done [#allocation6], 8192
    $region17: #{tpu_custom_call.1} parent=1 // pred_fallthru
      _
    %p40 = scmp.eq.s32.totalorder 0, 0
    // Predicated region
    $region18: #{tpu_custom_call.1} parent=1 // pred_check
      %p41 = pneg %p40
    $region19: #{tpu_custom_call.1} parent=1 // pred_check_branch
      %43 = sbr.rel (%p41) target = $region21
    $region20: #{tpu_custom_call.1} parent=1 // pred_region
      %44 = vst [vmem:[#allocation7] sm:$0xff] 0.0
      %45 = vst [vmem:[#allocation7 + $0x8] sm:$0xff] 0.0
      %46 = vst [vmem:[#allocation7 + $0x10] sm:$0xff] 0.0
      %47 = vst [vmem:[#allocation7 + $0x18] sm:$0xff] 0.0
      %48 = vst [vmem:[#allocation7 + $0x20] sm:$0xff] 0.0
      %49 = vst [vmem:[#allocation7 + $0x28] sm:$0xff] 0.0
      %50 = vst [vmem:[#allocation7 + $0x30] sm:$0xff] 0.0
      %51 = vst [vmem:[#allocation7 + $0x38] sm:$0xff] 0.0
      %52 = vst [vmem:[#allocation7 + $0x40] sm:$0xff] 0.0
      %53 = vst [vmem:[#allocation7 + $0x48] sm:$0xff] 0.0
      %54 = vst [vmem:[#allocation7 + $0x50] sm:$0xff] 0.0
      %55 = vst [vmem:[#allocation7 + $0x58] sm:$0xff] 0.0
      %56 = vst [vmem:[#allocation7 + $0x60] sm:$0xff] 0.0
      %57 = vst [vmem:[#allocation7 + $0x68] sm:$0xff] 0.0
      %58 = vst [vmem:[#allocation7 + $0x70] sm:$0xff] 0.0
      %59 = vst [vmem:[#allocation7 + $0x78] sm:$0xff] 0.0
      %60 = vst [vmem:[#allocation7 + $0x80] sm:$0xff] 0.0
      %61 = vst [vmem:[#allocation7 + $0x88] sm:$0xff] 0.0
      %62 = vst [vmem:[#allocation7 + $0x90] sm:$0xff] 0.0
      %63 = vst [vmem:[#allocation7 + $0x98] sm:$0xff] 0.0
      %64 = vst [vmem:[#allocation7 + $0xa0] sm:$0xff] 0.0
      %65 = vst [vmem:[#allocation7 + $0xa8] sm:$0xff] 0.0
      %66 = vst [vmem:[#allocation7 + $0xb0] sm:$0xff] 0.0
      %67 = vst [vmem:[#allocation7 + $0xb8] sm:$0xff] 0.0
      %68 = vst [vmem:[#allocation7 + $0xc0] sm:$0xff] 0.0
      %69 = vst [vmem:[#allocation7 + $0xc8] sm:$0xff] 0.0
      %70 = vst [vmem:[#allocation7 + $0xd0] sm:$0xff] 0.0
      %71 = vst [vmem:[#allocation7 + $0xd8] sm:$0xff] 0.0
      %72 = vst [vmem:[#allocation7 + $0xe0] sm:$0xff] 0.0
      %73 = vst [vmem:[#allocation7 + $0xe8] sm:$0xff] 0.0
      %74 = vst [vmem:[#allocation7 + $0xf0] sm:$0xff] 0.0
      %75 = vst [vmem:[#allocation7 + $0xf8] sm:$0xff] 0.0
      %76 = vst [vmem:[#allocation7 + $0x100] sm:$0xff] 0.0
      %77 = vst [vmem:[#allocation7 + $0x108] sm:$0xff] 0.0
      %78 = vst [vmem:[#allocation7 + $0x110] sm:$0xff] 0.0
      %79 = vst [vmem:[#allocation7 + $0x118] sm:$0xff] 0.0
      %80 = vst [vmem:[#allocation7 + $0x120] sm:$0xff] 0.0
      %81 = vst [vmem:[#allocation7 + $0x128] sm:$0xff] 0.0
      %82 = vst [vmem:[#allocation7 + $0x130] sm:$0xff] 0.0
      %83 = vst [vmem:[#allocation7 + $0x138] sm:$0xff] 0.0
      %84 = vst [vmem:[#allocation7 + $0x140] sm:$0xff] 0.0
      %85 = vst [vmem:[#allocation7 + $0x148] sm:$0xff] 0.0
      %86 = vst [vmem:[#allocation7 + $0x150] sm:$0xff] 0.0
      %87 = vst [vmem:[#allocation7 + $0x158] sm:$0xff] 0.0
      %88 = vst [vmem:[#allocation7 + $0x160] sm:$0xff] 0.0
      %89 = vst [vmem:[#allocation7 + $0x168] sm:$0xff] 0.0
      %90 = vst [vmem:[#allocation7 + $0x170] sm:$0xff] 0.0
      %91 = vst [vmem:[#allocation7 + $0x178] sm:$0xff] 0.0
      %92 = vst [vmem:[#allocation7 + $0x180] sm:$0xff] 0.0
      %93 = vst [vmem:[#allocation7 + $0x188] sm:$0xff] 0.0
      %94 = vst [vmem:[#allocation7 + $0x190] sm:$0xff] 0.0
      %95 = vst [vmem:[#allocation7 + $0x198] sm:$0xff] 0.0
      %96 = vst [vmem:[#allocation7 + $0x1a0] sm:$0xff] 0.0
      %97 = vst [vmem:[#allocation7 + $0x1a8] sm:$0xff] 0.0
      %98 = vst [vmem:[#allocation7 + $0x1b0] sm:$0xff] 0.0
      %99 = vst [vmem:[#allocation7 + $0x1b8] sm:$0xff] 0.0
      %100 = vst [vmem:[#allocation7 + $0x1c0] sm:$0xff] 0.0
      %101 = vst [vmem:[#allocation7 + $0x1c8] sm:$0xff] 0.0
      %102 = vst [vmem:[#allocation7 + $0x1d0] sm:$0xff] 0.0
      %103 = vst [vmem:[#allocation7 + $0x1d8] sm:$0xff] 0.0
      %104 = vst [vmem:[#allocation7 + $0x1e0] sm:$0xff] 0.0
      %105 = vst [vmem:[#allocation7 + $0x1e8] sm:$0xff] 0.0
      %106 = vst [vmem:[#allocation7 + $0x1f0] sm:$0xff] 0.0
      %107 = vst [vmem:[#allocation7 + $0x1f8] sm:$0xff] 0.0
    $region21: #{tpu_custom_call.1} parent=1 // pred_fallthru
      _
    %v108 = vld [vmem:[#allocation7] sm:$0xff]
    %v109 = vld [vmem:[#allocation7 + $0x8] sm:$0xff]
    %v110 = vld [vmem:[#allocation7 + $0x10] sm:$0xff]
    %v111 = vld [vmem:[#allocation7 + $0x18] sm:$0xff]
    %v112 = vld [vmem:[#allocation7 + $0x20] sm:$0xff]
    %v113 = vld [vmem:[#allocation7 + $0x28] sm:$0xff]
    %v114 = vld [vmem:[#allocation7 + $0x30] sm:$0xff]
    %v115 = vld [vmem:[#allocation7 + $0x38] sm:$0xff]
    %v116 = vld [vmem:[#allocation7 + $0x40] sm:$0xff]
    %v117 = vld [vmem:[#allocation7 + $0x48] sm:$0xff]
    %v118 = vld [vmem:[#allocation7 + $0x50] sm:$0xff]
    %v119 = vld [vmem:[#allocation7 + $0x58] sm:$0xff]
    %v120 = vld [vmem:[#allocation7 + $0x60] sm:$0xff]
    %v121 = vld [vmem:[#allocation7 + $0x68] sm:$0xff]
    %v122 = vld [vmem:[#allocation7 + $0x70] sm:$0xff]
    %v123 = vld [vmem:[#allocation7 + $0x78] sm:$0xff]
    %v124 = vld [vmem:[#allocation7 + $0x80] sm:$0xff]
    %v125 = vld [vmem:[#allocation7 + $0x88] sm:$0xff]
    %v126 = vld [vmem:[#allocation7 + $0x90] sm:$0xff]
    %v127 = vld [vmem:[#allocation7 + $0x98] sm:$0xff]
    %v128 = vld [vmem:[#allocation7 + $0xa0] sm:$0xff]
    %v129 = vld [vmem:[#allocation7 + $0xa8] sm:$0xff]
    %v130 = vld [vmem:[#allocation7 + $0xb0] sm:$0xff]
    %v131 = vld [vmem:[#allocation7 + $0xb8] sm:$0xff]
    %v132 = vld [vmem:[#allocation7 + $0xc0] sm:$0xff]
    %v133 = vld [vmem:[#allocation7 + $0xc8] sm:$0xff]
    %v134 = vld [vmem:[#allocation7 + $0xd0] sm:$0xff]
    %v135 = vld [vmem:[#allocation7 + $0xd8] sm:$0xff]
    %v136 = vld [vmem:[#allocation7 + $0xe0] sm:$0xff]
    %v137 = vld [vmem:[#allocation7 + $0xe8] sm:$0xff]
    %v138 = vld [vmem:[#allocation7 + $0xf0] sm:$0xff]
    %v139 = vld [vmem:[#allocation7 + $0xf8] sm:$0xff]
    %v140 = vld [vmem:[#allocation7 + $0x100] sm:$0xff]
    %v141 = vld [vmem:[#allocation7 + $0x108] sm:$0xff]
    %v142 = vld [vmem:[#allocation7 + $0x110] sm:$0xff]
    %v143 = vld [vmem:[#allocation7 + $0x118] sm:$0xff]
    %v144 = vld [vmem:[#allocation7 + $0x120] sm:$0xff]
    %v145 = vld [vmem:[#allocation7 + $0x128] sm:$0xff]
    %v146 = vld [vmem:[#allocation7 + $0x130] sm:$0xff]
    %v147 = vld [vmem:[#allocation7 + $0x138] sm:$0xff]
    %v148 = vld [vmem:[#allocation7 + $0x140] sm:$0xff]
    %v149 = vld [vmem:[#allocation7 + $0x148] sm:$0xff]
    %v150 = vld [vmem:[#allocation7 + $0x150] sm:$0xff]
    %v151 = vld [vmem:[#allocation7 + $0x158] sm:$0xff]
    %v152 = vld [vmem:[#allocation7 + $0x160] sm:$0xff]
    %v153 = vld [vmem:[#allocation7 + $0x168] sm:$0xff]
    %v154 = vld [vmem:[#allocation7 + $0x170] sm:$0xff]
    %v155 = vld [vmem:[#allocation7 + $0x178] sm:$0xff]
    %v156 = vld [vmem:[#allocation7 + $0x180] sm:$0xff]
    %v157 = vld [vmem:[#allocation7 + $0x188] sm:$0xff]
    %v158 = vld [vmem:[#allocation7 + $0x190] sm:$0xff]
    %v159 = vld [vmem:[#allocation7 + $0x198] sm:$0xff]
    %v160 = vld [vmem:[#allocation7 + $0x1a0] sm:$0xff]
    %v161 = vld [vmem:[#allocation7 + $0x1a8] sm:$0xff]
    %v162 = vld [vmem:[#allocation7 + $0x1b0] sm:$0xff]
    %v163 = vld [vmem:[#allocation7 + $0x1b8] sm:$0xff]
    %v164 = vld [vmem:[#allocation7 + $0x1c0] sm:$0xff]
    %v165 = vld [vmem:[#allocation7 + $0x1c8] sm:$0xff]
    %v166 = vld [vmem:[#allocation7 + $0x1d0] sm:$0xff]
    %v167 = vld [vmem:[#allocation7 + $0x1d8] sm:$0xff]
    %v168 = vld [vmem:[#allocation7 + $0x1e0] sm:$0xff]
    %v169 = vld [vmem:[#allocation7 + $0x1e8] sm:$0xff]
    %v170 = vld [vmem:[#allocation7 + $0x1f0] sm:$0xff]
    %v171 = vld [vmem:[#allocation7 + $0x1f8] sm:$0xff]
    %v172 = vld [vmem:[#allocation2] sm:$0xff]
    %v173 = vld [vmem:[#allocation2 + $0x8] sm:$0xff]
    %v174 = vld [vmem:[#allocation2 + $0x10] sm:$0xff]
    %v175 = vld [vmem:[#allocation2 + $0x18] sm:$0xff]
    %v176 = vld [vmem:[#allocation2 + $0x20] sm:$0xff]
    %v177 = vld [vmem:[#allocation2 + $0x28] sm:$0xff]
    %v178 = vld [vmem:[#allocation2 + $0x30] sm:$0xff]
    %v179 = vld [vmem:[#allocation2 + $0x38] sm:$0xff]
    %v180 = vld [vmem:[#allocation2 + $0x40] sm:$0xff]
    %v181 = vld [vmem:[#allocation2 + $0x48] sm:$0xff]
    %v182 = vld [vmem:[#allocation2 + $0x50] sm:$0xff]
    %v183 = vld [vmem:[#allocation2 + $0x58] sm:$0xff]
    %v184 = vld [vmem:[#allocation2 + $0x60] sm:$0xff]
    %v185 = vld [vmem:[#allocation2 + $0x68] sm:$0xff]
    %v186 = vld [vmem:[#allocation2 + $0x70] sm:$0xff]
    %v187 = vld [vmem:[#allocation2 + $0x78] sm:$0xff]
    %v188 = vld [vmem:[#allocation2 + $0x80] sm:$0xff]
    %v189 = vld [vmem:[#allocation2 + $0x88] sm:$0xff]
    %v190 = vld [vmem:[#allocation2 + $0x90] sm:$0xff]
    %v191 = vld [vmem:[#allocation2 + $0x98] sm:$0xff]
    %v192 = vld [vmem:[#allocation2 + $0xa0] sm:$0xff]
    %v193 = vld [vmem:[#allocation2 + $0xa8] sm:$0xff]
    %v194 = vld [vmem:[#allocation2 + $0xb0] sm:$0xff]
    %v195 = vld [vmem:[#allocation2 + $0xb8] sm:$0xff]
    %v196 = vld [vmem:[#allocation2 + $0xc0] sm:$0xff]
    %v197 = vld [vmem:[#allocation2 + $0xc8] sm:$0xff]
    %v198 = vld [vmem:[#allocation2 + $0xd0] sm:$0xff]
    %v199 = vld [vmem:[#allocation2 + $0xd8] sm:$0xff]
    %v200 = vld [vmem:[#allocation2 + $0xe0] sm:$0xff]
    %v201 = vld [vmem:[#allocation2 + $0xe8] sm:$0xff]
    %v202 = vld [vmem:[#allocation2 + $0xf0] sm:$0xff]
    %v203 = vld [vmem:[#allocation2 + $0xf8] sm:$0xff]
    %v204 = vld [vmem:[#allocation2 + $0x100] sm:$0xff]
    %v205 = vld [vmem:[#allocation2 + $0x108] sm:$0xff]
    %v206 = vld [vmem:[#allocation2 + $0x110] sm:$0xff]
    %v207 = vld [vmem:[#allocation2 + $0x118] sm:$0xff]
    %v208 = vld [vmem:[#allocation2 + $0x120] sm:$0xff]
    %v209 = vld [vmem:[#allocation2 + $0x128] sm:$0xff]
    %v210 = vld [vmem:[#allocation2 + $0x130] sm:$0xff]
    %v211 = vld [vmem:[#allocation2 + $0x138] sm:$0xff]
    %v212 = vld [vmem:[#allocation2 + $0x140] sm:$0xff]
    %v213 = vld [vmem:[#allocation2 + $0x148] sm:$0xff]
    %v214 = vld [vmem:[#allocation2 + $0x150] sm:$0xff]
    %v215 = vld [vmem:[#allocation2 + $0x158] sm:$0xff]
    %v216 = vld [vmem:[#allocation2 + $0x160] sm:$0xff]
    %v217 = vld [vmem:[#allocation2 + $0x168] sm:$0xff]
    %v218 = vld [vmem:[#allocation2 + $0x170] sm:$0xff]
    %v219 = vld [vmem:[#allocation2 + $0x178] sm:$0xff]
    %v220 = vld [vmem:[#allocation2 + $0x180] sm:$0xff]
    %v221 = vld [vmem:[#allocation2 + $0x188] sm:$0xff]
    %v222 = vld [vmem:[#allocation2 + $0x190] sm:$0xff]
    %v223 = vld [vmem:[#allocation2 + $0x198] sm:$0xff]
    %v224 = vld [vmem:[#allocation2 + $0x1a0] sm:$0xff]
    %v225 = vld [vmem:[#allocation2 + $0x1a8] sm:$0xff]
    %v226 = vld [vmem:[#allocation2 + $0x1b0] sm:$0xff]
    %v227 = vld [vmem:[#allocation2 + $0x1b8] sm:$0xff]
    %v228 = vld [vmem:[#allocation2 + $0x1c0] sm:$0xff]
    %v229 = vld [vmem:[#allocation2 + $0x1c8] sm:$0xff]
    %v230 = vld [vmem:[#allocation2 + $0x1d0] sm:$0xff]
    %v231 = vld [vmem:[#allocation2 + $0x1d8] sm:$0xff]
    %v232 = vld [vmem:[#allocation2 + $0x1e0] sm:$0xff]
    %v233 = vld [vmem:[#allocation2 + $0x1e8] sm:$0xff]
    %v234 = vld [vmem:[#allocation2 + $0x1f0] sm:$0xff]
    %v235 = vld [vmem:[#allocation2 + $0x1f8] sm:$0xff]
    %v236 = vld [vmem:[#allocation5] sm:$0xff]
    %v237 = vld [vmem:[#allocation5 + $0x8] sm:$0xff]
    %v238 = vld [vmem:[#allocation5 + $0x10] sm:$0xff]
    %v239 = vld [vmem:[#allocation5 + $0x18] sm:$0xff]
    %v240 = vld [vmem:[#allocation5 + $0x20] sm:$0xff]
    %v241 = vld [vmem:[#allocation5 + $0x28] sm:$0xff]
    %v242 = vld [vmem:[#allocation5 + $0x30] sm:$0xff]
    %v243 = vld [vmem:[#allocation5 + $0x38] sm:$0xff]
    %v244 = vld [vmem:[#allocation5 + $0x40] sm:$0xff]
    %v245 = vld [vmem:[#allocation5 + $0x48] sm:$0xff]
    %v246 = vld [vmem:[#allocation5 + $0x50] sm:$0xff]
    %v247 = vld [vmem:[#allocation5 + $0x58] sm:$0xff]
    %v248 = vld [vmem:[#allocation5 + $0x60] sm:$0xff]
    %v249 = vld [vmem:[#allocation5 + $0x68] sm:$0xff]
    %v250 = vld [vmem:[#allocation5 + $0x70] sm:$0xff]
    %v251 = vld [vmem:[#allocation5 + $0x78] sm:$0xff]
    %v252 = vld [vmem:[#allocation5 + $0x80] sm:$0xff]
    %v253 = vld [vmem:[#allocation5 + $0x88] sm:$0xff]
    %v254 = vld [vmem:[#allocation5 + $0x90] sm:$0xff]
    %v255 = vld [vmem:[#allocation5 + $0x98] sm:$0xff]
    %v256 = vld [vmem:[#allocation5 + $0xa0] sm:$0xff]
    %v257 = vld [vmem:[#allocation5 + $0xa8] sm:$0xff]
    %v258 = vld [vmem:[#allocation5 + $0xb0] sm:$0xff]
    %v259 = vld [vmem:[#allocation5 + $0xb8] sm:$0xff]
    %v260 = vld [vmem:[#allocation5 + $0xc0] sm:$0xff]
    %v261 = vld [vmem:[#allocation5 + $0xc8] sm:$0xff]
    %v262 = vld [vmem:[#allocation5 + $0xd0] sm:$0xff]
    %v263 = vld [vmem:[#allocation5 + $0xd8] sm:$0xff]
    %v264 = vld [vmem:[#allocation5 + $0xe0] sm:$0xff]
    %v265 = vld [vmem:[#allocation5 + $0xe8] sm:$0xff]
    %v266 = vld [vmem:[#allocation5 + $0xf0] sm:$0xff]
    %v267 = vld [vmem:[#allocation5 + $0xf8] sm:$0xff]
    %v268 = vld [vmem:[#allocation5 + $0x100] sm:$0xff]
    %v269 = vld [vmem:[#allocation5 + $0x108] sm:$0xff]
    %v270 = vld [vmem:[#allocation5 + $0x110] sm:$0xff]
    %v271 = vld [vmem:[#allocation5 + $0x118] sm:$0xff]
    %v272 = vld [vmem:[#allocation5 + $0x120] sm:$0xff]
    %v273 = vld [vmem:[#allocation5 + $0x128] sm:$0xff]
    %v274 = vld [vmem:[#allocation5 + $0x130] sm:$0xff]
    %v275 = vld [vmem:[#allocation5 + $0x138] sm:$0xff]
    %v276 = vld [vmem:[#allocation5 + $0x140] sm:$0xff]
    %v277 = vld [vmem:[#allocation5 + $0x148] sm:$0xff]
    %v278 = vld [vmem:[#allocation5 + $0x150] sm:$0xff]
    %v279 = vld [vmem:[#allocation5 + $0x158] sm:$0xff]
    %v280 = vld [vmem:[#allocation5 + $0x160] sm:$0xff]
    %v281 = vld [vmem:[#allocation5 + $0x168] sm:$0xff]
    %v282 = vld [vmem:[#allocation5 + $0x170] sm:$0xff]
    %v283 = vld [vmem:[#allocation5 + $0x178] sm:$0xff]
    %v284 = vld [vmem:[#allocation5 + $0x180] sm:$0xff]
    %v285 = vld [vmem:[#allocation5 + $0x188] sm:$0xff]
    %v286 = vld [vmem:[#allocation5 + $0x190] sm:$0xff]
    %v287 = vld [vmem:[#allocation5 + $0x198] sm:$0xff]
    %v288 = vld [vmem:[#allocation5 + $0x1a0] sm:$0xff]
    %v289 = vld [vmem:[#allocation5 + $0x1a8] sm:$0xff]
    %v290 = vld [vmem:[#allocation5 + $0x1b0] sm:$0xff]
    %v291 = vld [vmem:[#allocation5 + $0x1b8] sm:$0xff]
    %v292 = vld [vmem:[#allocation5 + $0x1c0] sm:$0xff]
    %v293 = vld [vmem:[#allocation5 + $0x1c8] sm:$0xff]
    %v294 = vld [vmem:[#allocation5 + $0x1d0] sm:$0xff]
    %v295 = vld [vmem:[#allocation5 + $0x1d8] sm:$0xff]
    %v296 = vld [vmem:[#allocation5 + $0x1e0] sm:$0xff]
    %v297 = vld [vmem:[#allocation5 + $0x1e8] sm:$0xff]
    %v298 = vld [vmem:[#allocation5 + $0x1f0] sm:$0xff]
    %v299 = vld [vmem:[#allocation5 + $0x1f8] sm:$0xff]
    %300 = vxpose.xlu0.b32.start [1/16] %v172, 128
    %301 = vxpose.xlu0.b32.cont [2/16] %v173, 128
    %302 = vxpose.xlu0.b32.cont [3/16] %v174, 128
    %303 = vxpose.xlu0.b32.cont [4/16] %v175, 128
    %304 = vxpose.xlu0.b32.cont [5/16] %v176, 128
    %305 = vxpose.xlu0.b32.cont [6/16] %v177, 128
    %306 = vxpose.xlu0.b32.cont [7/16] %v178, 128
    %307 = vxpose.xlu0.b32.cont [8/16] %v179, 128
    %308 = vxpose.xlu0.b32.cont [9/16] %v180, 128
    %309 = vxpose.xlu0.b32.cont [10/16] %v181, 128
    %310 = vxpose.xlu0.b32.cont [11/16] %v182, 128
    %311 = vxpose.xlu0.b32.cont [12/16] %v183, 128
    %312 = vxpose.xlu0.b32.cont [13/16] %v184, 128
    %313 = vxpose.xlu0.b32.cont [14/16] %v185, 128
    %314 = vxpose.xlu0.b32.cont [15/16] %v186, 128
    %315 = vxpose.xlu0.b32.end [16/16] %v187, 128
    %v316 = vpop.trf.xlu0
    %v317 = vpop.trf.xlu0
    %v318 = vpop.trf.xlu0
    %v319 = vpop.trf.xlu0
    %v320 = vpop.trf.xlu0
    %v321 = vpop.trf.xlu0
    %v322 = vpop.trf.xlu0
    %v323 = vpop.trf.xlu0
    %v324 = vpop.trf.xlu0
    %v325 = vpop.trf.xlu0
    %v326 = vpop.trf.xlu0
    %v327 = vpop.trf.xlu0
    %v328 = vpop.trf.xlu0
    %v329 = vpop.trf.xlu0
    %v330 = vpop.trf.xlu0
    %v331 = vpop.trf.xlu0
    %332 = vmatprep.subr.mxu0 0.0
    %333 = vmatpush1.msra.mxu0 %v236
    %334 = vmatprep.subr.mxu0 0.0
    %335 = vmatpush1.msra.mxu0 %v237
    %336 = vmatprep.subr.mxu0 0.0
    %337 = vmatpush1.msra.mxu0 %v238
    %338 = vmatprep.subr.mxu0 0.0
    %339 = vmatpush1.msra.mxu0 %v239
    %340 = vmatprep.subr.mxu0 0.0
    %341 = vmatpush1.msra.mxu0 %v240
    %342 = vmatprep.subr.mxu0 0.0
    %343 = vmatpush1.msra.mxu0 %v241
    %344 = vmatprep.subr.mxu0 0.0
    %345 = vmatpush1.msra.mxu0 %v242
    %346 = vmatprep.subr.mxu0 0.0
    %347 = vmatpush1.msra.mxu0 %v243
    %348 = vmatprep.subr.mxu0 0.0
    %349 = vmatpush1.msra.mxu0 %v244
    %350 = vmatprep.subr.mxu0 0.0
    %351 = vmatpush1.msra.mxu0 %v245
    %352 = vmatprep.subr.mxu0 0.0
    %353 = vmatpush1.msra.mxu0 %v246
    %354 = vmatprep.subr.mxu0 0.0
    %355 = vmatpush1.msra.mxu0 %v247
    %356 = vmatprep.subr.mxu0 0.0
    %357 = vmatpush1.msra.mxu0 %v248
    %358 = vmatprep.subr.mxu0 0.0
    %359 = vmatpush1.msra.mxu0 %v249
    %360 = vmatprep.subr.mxu0 0.0
    %361 = vmatpush1.msra.mxu0 %v250
    %362 = vmatprep.subr.mxu0 0.0
    %363 = vmatpush1.msra.mxu0 %v251
    %364 = vmatprep.subr.mxu0 0.0
    %365 = vmatpush1.msra.mxu0 0.0
    %366 = vmatprep.subr.mxu0 0.0
    %367 = vmatpush1.msra.mxu0 0.0
    %368 = vmatprep.subr.mxu0 0.0
    %369 = vmatpush1.msra.mxu0 0.0
    %370 = vmatprep.subr.mxu0 0.0
    %371 = vmatpush1.msra.mxu0 0.0
    %372 = vmatprep.subr.mxu0 0.0
    %373 = vmatpush1.msra.mxu0 0.0
    %374 = vmatprep.subr.mxu0 0.0
    %375 = vmatpush1.msra.mxu0 0.0
    %376 = vmatprep.subr.mxu0 0.0
    %377 = vmatpush1.msra.mxu0 0.0
    %378 = vmatprep.subr.mxu0 0.0
    %379 = vmatpush1.msra.mxu0 0.0
    %380 = vmatprep.subr.mxu0 0.0
    %381 = vmatpush1.msra.mxu0 0.0
    %382 = vmatprep.subr.mxu0 0.0
    %383 = vmatpush1.msra.mxu0 0.0
    %384 = vmatprep.subr.mxu0 0.0
    %385 = vmatpush1.msra.mxu0 0.0
    %386 = vmatprep.subr.mxu0 0.0
    %387 = vmatpush1.msra.mxu0 0.0
    %388 = vmatprep.subr.mxu0 0.0
    %389 = vmatpush1.msra.mxu0 0.0
    %390 = vmatprep.subr.mxu0 0.0
    %391 = vmatpush1.msra.mxu0 0.0
    %392 = vmatprep.subr.mxu0 0.0
    %393 = vmatpush1.msra.mxu0 0.0
    %394 = vmatprep.subr.mxu0 0.0
    %395 = vmatpush1.msra.mxu0 0.0
    %396 = vmatprep.mubr.f32.mxu0 0.0
    %397 = vmatmul.mubr.f32.gmra.mrb[0].mxu0 %v316
    %v398 = vpop.f32.mrb[0].mxu0
    %v399 = vadd.f32 0.0, %v398
    %v400 = vpop.f32.mrb[0].mxu0
    %401 = vmatprep.mubr.f32.mxu0 0.0
    %402 = vmatmul.mubr.f32.gmra.mrb[0].mxu0 %v317
    %v403 = vpop.f32.mrb[0].mxu0
    %v404 = vadd.f32 0.0, %v403
    %v405 = vpop.f32.mrb[0].mxu0
    %406 = vmatprep.mubr.f32.mxu0 0.0
    %407 = vmatmul.mubr.f32.gmra.mrb[0].mxu0 %v318
    %v408 = vpop.f32.mrb[0].mxu0
    %v409 = vadd.f32 0.0, %v408
    %v410 = vpop.f32.mrb[0].mxu0
    %411 = vmatprep.mubr.f32.mxu0 0.0
    %412 = vmatmul.mubr.f32.gmra.mrb[0].mxu0 %v319
    %v413 = vpop.f32.mrb[0].mxu0
    %v414 = vadd.f32 0.0, %v413
    %v415 = vpop.f32.mrb[0].mxu0
    %416 = vmatprep.mubr.f32.mxu0 0.0
    %417 = vmatmul.mubr.f32.gmra.mrb[0].mxu0 %v320
    %v418 = vpop.f32.mrb[0].mxu0
    %v419 = vadd.f32 0.0, %v418
    %v420 = vpop.f32.mrb[0].mxu0
    %421 = vmatprep.mubr.f32.mxu0 0.0
    %422 = vmatmul.mubr.f32.gmra.mrb[0].mxu0 %v321
    %v423 = vpop.f32.mrb[0].mxu0
    %v424 = vadd.f32 0.0, %v423
    %v425 = vpop.f32.mrb[0].mxu0
    %426 = vmatprep.mubr.f32.mxu0 0.0
    %427 = vmatmul.mubr.f32.gmra.mrb[0].mxu0 %v322
    %v428 = vpop.f32.mrb[0].mxu0
    %v429 = vadd.f32 0.0, %v428
    %v430 = vpop.f32.mrb[0].mxu0
    %431 = vmatprep.mubr.f32.mxu0 0.0
    %432 = vmatmul.mubr.f32.gmra.mrb[0].mxu0 %v323
    %v433 = vpop.f32.mrb[0].mxu0
    %v434 = vadd.f32 0.0, %v433
    %v435 = vpop.f32.mrb[0].mxu0
    %436 = vmatprep.mubr.f32.mxu0 0.0
    %437 = vmatmul.mubr.f32.gmra.mrb[0].mxu0 %v324
    %v438 = vpop.f32.mrb[0].mxu0
    %v439 = vadd.f32 0.0, %v438
    %v440 = vpop.f32.mrb[0].mxu0
    %441 = vmatprep.mubr.f32.mxu0 0.0
    %442 = vmatmul.mubr.f32.gmra.mrb[0].mxu0 %v325
    %v443 = vpop.f32.mrb[0].mxu0
    %v444 = vadd.f32 0.0, %v443
    %v445 = vpop.f32.mrb[0].mxu0
    %446 = vmatprep.mubr.f32.mxu0 0.0
    %447 = vmatmul.mubr.f32.gmra.mrb[0].mxu0 %v326
    %v448 = vpop.f32.mrb[0].mxu0
    %v449 = vadd.f32 0.0, %v448
    %v450 = vpop.f32.mrb[0].mxu0
    %451 = vmatprep.mubr.f32.mxu0 0.0
    %452 = vmatmul.mubr.f32.gmra.mrb[0].mxu0 %v327
    %v453 = vpop.f32.mrb[0].mxu0
    %v454 = vadd.f32 0.0, %v453
    %v455 = vpop.f32.mrb[0].mxu0
    %456 = vmatprep.mubr.f32.mxu0 0.0
    %457 = vmatmul.mubr.f32.gmra.mrb[0].mxu0 %v328
    %v458 = vpop.f32.mrb[0].mxu0
    %v459 = vadd.f32 0.0, %v458
    %v460 = vpop.f32.mrb[0].mxu0
    %461 = vmatprep.mubr.f32.mxu0 0.0
    %462 = vmatmul.mubr.f32.gmra.mrb[0].mxu0 %v329
    %v463 = vpop.f32.mrb[0].mxu0
    %v464 = vadd.f32 0.0, %v463
    %v465 = vpop.f32.mrb[0].mxu0
    %466 = vmatprep.mubr.f32.mxu0 0.0
    %467 = vmatmul.mubr.f32.gmra.mrb[0].mxu0 %v330
    %v468 = vpop.f32.mrb[0].mxu0
    %v469 = vadd.f32 0.0, %v468
    %v470 = vpop.f32.mrb[0].mxu0
    %471 = vmatprep.mubr.f32.mxu0 0.0
    %472 = vmatmul.mubr.f32.gmra.mrb[0].mxu0 %v331
    %v473 = vpop.f32.mrb[0].mxu0
    %v474 = vadd.f32 0.0, %v473
    %v475 = vpop.f32.mrb[0].mxu0
    %476 = vdwg.mxu0
    %477 = vxpose.xlu0.b32.start [1/16] %v188, 128
    %478 = vxpose.xlu0.b32.cont [2/16] %v189, 128
    %479 = vxpose.xlu0.b32.cont [3/16] %v190, 128
    %480 = vxpose.xlu0.b32.cont [4/16] %v191, 128
    %481 = vxpose.xlu0.b32.cont [5/16] %v192, 128
    %482 = vxpose.xlu0.b32.cont [6/16] %v193, 128
    %483 = vxpose.xlu0.b32.cont [7/16] %v194, 128
    %484 = vxpose.xlu0.b32.cont [8/16] %v195, 128
    %485 = vxpose.xlu0.b32.cont [9/16] %v196, 128
    %486 = vxpose.xlu0.b32.cont [10/16] %v197, 128
    %487 = vxpose.xlu0.b32.cont [11/16] %v198, 128
    %488 = vxpose.xlu0.b32.cont [12/16] %v199, 128
    %489 = vxpose.xlu0.b32.cont [13/16] %v200, 128
    %490 = vxpose.xlu0.b32.cont [14/16] %v201, 128
    %491 = vxpose.xlu0.b32.cont [15/16] %v202, 128
    %492 = vxpose.xlu0.b32.end [16/16] %v203, 128
    %v493 = vpop.trf.xlu0
    %v494 = vpop.trf.xlu0
    %v495 = vpop.trf.xlu0
    %v496 = vpop.trf.xlu0
    %v497 = vpop.trf.xlu0
    %v498 = vpop.trf.xlu0
    %v499 = vpop.trf.xlu0
    %v500 = vpop.trf.xlu0
    %v501 = vpop.trf.xlu0
    %v502 = vpop.trf.xlu0
    %v503 = vpop.trf.xlu0
    %v504 = vpop.trf.xlu0
    %v505 = vpop.trf.xlu0
    %v506 = vpop.trf.xlu0
    %v507 = vpop.trf.xlu0
    %v508 = vpop.trf.xlu0
    %509 = vmatprep.subr.mxu0 0.0
    %510 = vmatpush1.msra.mxu0 %v252
    %511 = vmatprep.subr.mxu0 0.0
    %512 = vmatpush1.msra.mxu0 %v253
    %513 = vmatprep.subr.mxu0 0.0
    %514 = vmatpush1.msra.mxu0 %v254
    %515 = vmatprep.subr.mxu0 0.0
    %516 = vmatpush1.msra.mxu0 %v255
    %517 = vmatprep.subr.mxu0 0.0
    %518 = vmatpush1.msra.mxu0 %v256
    %519 = vmatprep.subr.mxu0 0.0
    %520 = vmatpush1.msra.mxu0 %v257
    %521 = vmatprep.subr.mxu0 0.0
    %522 = vmatpush1.msra.mxu0 %v258
    %523 = vmatprep.subr.mxu0 0.0
    %524 = vmatpush1.msra.mxu0 %v259
    %525 = vmatprep.subr.mxu0 0.0
    %526 = vmatpush1.msra.mxu0 %v260
    %527 = vmatprep.subr.mxu0 0.0
    %528 = vmatpush1.msra.mxu0 %v261
    %529 = vmatprep.subr.mxu0 0.0
    %530 = vmatpush1.msra.mxu0 %v262
    %531 = vmatprep.subr.mxu0 0.0
    %532 = vmatpush1.msra.mxu0 %v263
    %533 = vmatprep.subr.mxu0 0.0
    %534 = vmatpush1.msra.mxu0 %v264
    %535 = vmatprep.subr.mxu0 0.0
    %536 = vmatpush1.msra.mxu0 %v265
    %537 = vmatprep.subr.mxu0 0.0
    %538 = vmatpush1.msra.mxu0 %v266
    %539 = vmatprep.subr.mxu0 0.0
    %540 = vmatpush1.msra.mxu0 %v267
    %541 = vmatprep.subr.mxu0 0.0
    %542 = vmatpush1.msra.mxu0 0.0
    %543 = vmatprep.subr.mxu0 0.0
    %544 = vmatpush1.msra.mxu0 0.0
    %545 = vmatprep.subr.mxu0 0.0
    %546 = vmatpush1.msra.mxu0 0.0
    %547 = vmatprep.subr.mxu0 0.0
    %548 = vmatpush1.msra.mxu0 0.0
    %549 = vmatprep.subr.mxu0 0.0
    %550 = vmatpush1.msra.mxu0 0.0
    %551 = vmatprep.subr.mxu0 0.0
    %552 = vmatpush1.msra.mxu0 0.0
    %553 = vmatprep.subr.mxu0 0.0
    %554 = vmatpush1.msra.mxu0 0.0
    %555 = vmatprep.subr.mxu0 0.0
    %556 = vmatpush1.msra.mxu0 0.0
    %557 = vmatprep.subr.mxu0 0.0
    %558 = vmatpush1.msra.mxu0 0.0
    %559 = vmatprep.subr.mxu0 0.0
    %560 = vmatpush1.msra.mxu0 0.0
    %561 = vmatprep.subr.mxu0 0.0
    %562 = vmatpush1.msra.mxu0 0.0
    %563 = vmatprep.subr.mxu0 0.0
    %564 = vmatpush1.msra.mxu0 0.0
    %565 = vmatprep.subr.mxu0 0.0
    %566 = vmatpush1.msra.mxu0 0.0
    %567 = vmatprep.subr.mxu0 0.0
    %568 = vmatpush1.msra.mxu0 0.0
    %569 = vmatprep.subr.mxu0 0.0
    %570 = vmatpush1.msra.mxu0 0.0
    %571 = vmatprep.subr.mxu0 0.0
    %572 = vmatpush1.msra.mxu0 0.0
    %573 = vmatprep.mubr.f32.mxu0 0.0
    %574 = vmatmul.mubr.f32.gmra.mrb[0].mxu0 %v493
    %v575 = vpop.f32.mrb[0].mxu0
    %v576 = vadd.f32 0.0, %v575
    %v577 = vpop.f32.mrb[0].mxu0
    %578 = vmatprep.mubr.f32.mxu0 0.0
    %579 = vmatmul.mubr.f32.gmra.mrb[0].mxu0 %v494
    %v580 = vpop.f32.mrb[0].mxu0
    %v581 = vadd.f32 0.0, %v580
    %v582 = vpop.f32.mrb[0].mxu0
    %583 = vmatprep.mubr.f32.mxu0 0.0
    %584 = vmatmul.mubr.f32.gmra.mrb[0].mxu0 %v495
    %v585 = vpop.f32.mrb[0].mxu0
    %v586 = vadd.f32 0.0, %v585
    %v587 = vpop.f32.mrb[0].mxu0
    %588 = vmatprep.mubr.f32.mxu0 0.0
    %589 = vmatmul.mubr.f32.gmra.mrb[0].mxu0 %v496
    %v590 = vpop.f32.mrb[0].mxu0
    %v591 = vadd.f32 0.0, %v590
    %v592 = vpop.f32.mrb[0].mxu0
    %593 = vmatprep.mubr.f32.mxu0 0.0
    %594 = vmatmul.mubr.f32.gmra.mrb[0].mxu0 %v497
    %v595 = vpop.f32.mrb[0].mxu0
    %v596 = vadd.f32 0.0, %v595
    %v597 = vpop.f32.mrb[0].mxu0
    %598 = vmatprep.mubr.f32.mxu0 0.0
    %599 = vmatmul.mubr.f32.gmra.mrb[0].mxu0 %v498
    %v600 = vpop.f32.mrb[0].mxu0
    %v601 = vadd.f32 0.0, %v600
    %v602 = vpop.f32.mrb[0].mxu0
    %603 = vmatprep.mubr.f32.mxu0 0.0
    %604 = vmatmul.mubr.f32.gmra.mrb[0].mxu0 %v499
    %v605 = vpop.f32.mrb[0].mxu0
    %v606 = vadd.f32 0.0, %v605
    %v607 = vpop.f32.mrb[0].mxu0
    %608 = vmatprep.mubr.f32.mxu0 0.0
    %609 = vmatmul.mubr.f32.gmra.mrb[0].mxu0 %v500
    %v610 = vpop.f32.mrb[0].mxu0
    %v611 = vadd.f32 0.0, %v610
    %v612 = vpop.f32.mrb[0].mxu0
    %613 = vmatprep.mubr.f32.mxu0 0.0
    %614 = vmatmul.mubr.f32.gmra.mrb[0].mxu0 %v501
    %v615 = vpop.f32.mrb[0].mxu0
    %v616 = vadd.f32 0.0, %v615
    %v617 = vpop.f32.mrb[0].mxu0
    %618 = vmatprep.mubr.f32.mxu0 0.0
    %619 = vmatmul.mubr.f32.gmra.mrb[0].mxu0 %v502
    %v620 = vpop.f32.mrb[0].mxu0
    %v621 = vadd.f32 0.0, %v620
    %v622 = vpop.f32.mrb[0].mxu0
    %623 = vmatprep.mubr.f32.mxu0 0.0
    %624 = vmatmul.mubr.f32.gmra.mrb[0].mxu0 %v503
    %v625 = vpop.f32.mrb[0].mxu0
    %v626 = vadd.f32 0.0, %v625
    %v627 = vpop.f32.mrb[0].mxu0
    %628 = vmatprep.mubr.f32.mxu0 0.0
    %629 = vmatmul.mubr.f32.gmra.mrb[0].mxu0 %v504
    %v630 = vpop.f32.mrb[0].mxu0
    %v631 = vadd.f32 0.0, %v630
    %v632 = vpop.f32.mrb[0].mxu0
    %633 = vmatprep.mubr.f32.mxu0 0.0
    %634 = vmatmul.mubr.f32.gmra.mrb[0].mxu0 %v505
    %v635 = vpop.f32.mrb[0].mxu0
    %v636 = vadd.f32 0.0, %v635
    %v637 = vpop.f32.mrb[0].mxu0
    %638 = vmatprep.mubr.f32.mxu0 0.0
    %639 = vmatmul.mubr.f32.gmra.mrb[0].mxu0 %v506
    %v640 = vpop.f32.mrb[0].mxu0
    %v641 = vadd.f32 0.0, %v640
    %v642 = vpop.f32.mrb[0].mxu0
    %643 = vmatprep.mubr.f32.mxu0 0.0
    %644 = vmatmul.mubr.f32.gmra.mrb[0].mxu0 %v507
    %v645 = vpop.f32.mrb[0].mxu0
    %v646 = vadd.f32 0.0, %v645
    %v647 = vpop.f32.mrb[0].mxu0
    %648 = vmatprep.mubr.f32.mxu0 0.0
    %649 = vmatmul.mubr.f32.gmra.mrb[0].mxu0 %v508
    %v650 = vpop.f32.mrb[0].mxu0
    %v651 = vadd.f32 0.0, %v650
    %v652 = vpop.f32.mrb[0].mxu0
    %653 = vdwg.mxu0
    %654 = vxpose.xlu0.b32.start [1/16] %v204, 128
    %655 = vxpose.xlu0.b32.cont [2/16] %v205, 128
    %656 = vxpose.xlu0.b32.cont [3/16] %v206, 128
    %657 = vxpose.xlu0.b32.cont [4/16] %v207, 128
    %658 = vxpose.xlu0.b32.cont [5/16] %v208, 128
    %659 = vxpose.xlu0.b32.cont [6/16] %v209, 128
    %660 = vxpose.xlu0.b32.cont [7/16] %v210, 128
    %661 = vxpose.xlu0.b32.cont [8/16] %v211, 128
    %662 = vxpose.xlu0.b32.cont [9/16] %v212, 128
    %663 = vxpose.xlu0.b32.cont [10/16] %v213, 128
    %664 = vxpose.xlu0.b32.cont [11/16] %v214, 128
    %665 = vxpose.xlu0.b32.cont [12/16] %v215, 128
    %666 = vxpose.xlu0.b32.cont [13/16] %v216, 128
    %667 = vxpose.xlu0.b32.cont [14/16] %v217, 128
    %668 = vxpose.xlu0.b32.cont [15/16] %v218, 128
    %669 = vxpose.xlu0.b32.end [16/16] %v219, 128
    %v670 = vpop.trf.xlu0
    %v671 = vpop.trf.xlu0
    %v672 = vpop.trf.xlu0
    %v673 = vpop.trf.xlu0
    %v674 = vpop.trf.xlu0
    %v675 = vpop.trf.xlu0
    %v676 = vpop.trf.xlu0
    %v677 = vpop.trf.xlu0
    %v678 = vpop.trf.xlu0
    %v679 = vpop.trf.xlu0
    %v680 = vpop.trf.xlu0
    %v681 = vpop.trf.xlu0
    %v682 = vpop.trf.xlu0
    %v683 = vpop.trf.xlu0
    %v684 = vpop.trf.xlu0
    %v685 = vpop.trf.xlu0
    %686 = vmatprep.subr.mxu0 0.0
    %687 = vmatpush1.msra.mxu0 %v268
    %688 = vmatprep.subr.mxu0 0.0
    %689 = vmatpush1.msra.mxu0 %v269
    %690 = vmatprep.subr.mxu0 0.0
    %691 = vmatpush1.msra.mxu0 %v270
    %692 = vmatprep.subr.mxu0 0.0
    %693 = vmatpush1.msra.mxu0 %v271
    %694 = vmatprep.subr.mxu0 0.0
    %695 = vmatpush1.msra.mxu0 %v272
    %696 = vmatprep.subr.mxu0 0.0
    %697 = vmatpush1.msra.mxu0 %v273
    %698 = vmatprep.subr.mxu0 0.0
    %699 = vmatpush1.msra.mxu0 %v274
    %700 = vmatprep.subr.mxu0 0.0
    %701 = vmatpush1.msra.mxu0 %v275
    %702 = vmatprep.subr.mxu0 0.0
    %703 = vmatpush1.msra.mxu0 %v276
    %704 = vmatprep.subr.mxu0 0.0
    %705 = vmatpush1.msra.mxu0 %v277
    %706 = vmatprep.subr.mxu0 0.0
    %707 = vmatpush1.msra.mxu0 %v278
    %708 = vmatprep.subr.mxu0 0.0
    %709 = vmatpush1.msra.mxu0 %v279
    %710 = vmatprep.subr.mxu0 0.0
    %711 = vmatpush1.msra.mxu0 %v280
    %712 = vmatprep.subr.mxu0 0.0
    %713 = vmatpush1.msra.mxu0 %v281
    %714 = vmatprep.subr.mxu0 0.0
    %715 = vmatpush1.msra.mxu0 %v282
    %716 = vmatprep.subr.mxu0 0.0
    %717 = vmatpush1.msra.mxu0 %v283
    %718 = vmatprep.subr.mxu0 0.0
    %719 = vmatpush1.msra.mxu0 0.0
    %720 = vmatprep.subr.mxu0 0.0
    %721 = vmatpush1.msra.mxu0 0.0
    %722 = vmatprep.subr.mxu0 0.0
    %723 = vmatpush1.msra.mxu0 0.0
    %724 = vmatprep.subr.mxu0 0.0
    %725 = vmatpush1.msra.mxu0 0.0
    %726 = vmatprep.subr.mxu0 0.0
    %727 = vmatpush1.msra.mxu0 0.0
    %728 = vmatprep.subr.mxu0 0.0
    %729 = vmatpush1.msra.mxu0 0.0
    %730 = vmatprep.subr.mxu0 0.0
    %731 = vmatpush1.msra.mxu0 0.0
    %732 = vmatprep.subr.mxu0 0.0
    %733 = vmatpush1.msra.mxu0 0.0
    %734 = vmatprep.subr.mxu0 0.0
    %735 = vmatpush1.msra.mxu0 0.0
    %736 = vmatprep.subr.mxu0 0.0
    %737 = vmatpush1.msra.mxu0 0.0
    %738 = vmatprep.subr.mxu0 0.0
    %739 = vmatpush1.msra.mxu0 0.0
    %740 = vmatprep.subr.mxu0 0.0
    %741 = vmatpush1.msra.mxu0 0.0
    %742 = vmatprep.subr.mxu0 0.0
    %743 = vmatpush1.msra.mxu0 0.0
    %744 = vmatprep.subr.mxu0 0.0
    %745 = vmatpush1.msra.mxu0 0.0
    %746 = vmatprep.subr.mxu0 0.0
    %747 = vmatpush1.msra.mxu0 0.0
    %748 = vmatprep.subr.mxu0 0.0
    %749 = vmatpush1.msra.mxu0 0.0
    %750 = vmatprep.mubr.f32.mxu0 0.0
    %751 = vmatmul.mubr.f32.gmra.mrb[0].mxu0 %v670
    %v752 = vpop.f32.mrb[0].mxu0
    %v753 = vadd.f32 0.0, %v752
    %v754 = vpop.f32.mrb[0].mxu0
    %755 = vmatprep.mubr.f32.mxu0 0.0
    %756 = vmatmul.mubr.f32.gmra.mrb[0].mxu0 %v671
    %v757 = vpop.f32.mrb[0].mxu0
    %v758 = vadd.f32 0.0, %v757
    %v759 = vpop.f32.mrb[0].mxu0
    %760 = vmatprep.mubr.f32.mxu0 0.0
    %761 = vmatmul.mubr.f32.gmra.mrb[0].mxu0 %v672
    %v762 = vpop.f32.mrb[0].mxu0
    %v763 = vadd.f32 0.0, %v762
    %v764 = vpop.f32.mrb[0].mxu0
    %765 = vmatprep.mubr.f32.mxu0 0.0
    %766 = vmatmul.mubr.f32.gmra.mrb[0].mxu0 %v673
    %v767 = vpop.f32.mrb[0].mxu0
    %v768 = vadd.f32 0.0, %v767
    %v769 = vpop.f32.mrb[0].mxu0
    %770 = vmatprep.mubr.f32.mxu0 0.0
    %771 = vmatmul.mubr.f32.gmra.mrb[0].mxu0 %v674
    %v772 = vpop.f32.mrb[0].mxu0
    %v773 = vadd.f32 0.0, %v772
    %v774 = vpop.f32.mrb[0].mxu0
    %775 = vmatprep.mubr.f32.mxu0 0.0
    %776 = vmatmul.mubr.f32.gmra.mrb[0].mxu0 %v675
    %v777 = vpop.f32.mrb[0].mxu0
    %v778 = vadd.f32 0.0, %v777
    %v779 = vpop.f32.mrb[0].mxu0
    %780 = vmatprep.mubr.f32.mxu0 0.0
    %781 = vmatmul.mubr.f32.gmra.mrb[0].mxu0 %v676
    %v782 = vpop.f32.mrb[0].mxu0
    %v783 = vadd.f32 0.0, %v782
    %v784 = vpop.f32.mrb[0].mxu0
    %785 = vmatprep.mubr.f32.mxu0 0.0
    %786 = vmatmul.mubr.f32.gmra.mrb[0].mxu0 %v677
    %v787 = vpop.f32.mrb[0].mxu0
    %v788 = vadd.f32 0.0, %v787
    %v789 = vpop.f32.mrb[0].mxu0
    %790 = vmatprep.mubr.f32.mxu0 0.0
    %791 = vmatmul.mubr.f32.gmra.mrb[0].mxu0 %v678
    %v792 = vpop.f32.mrb[0].mxu0
    %v793 = vadd.f32 0.0, %v792
    %v794 = vpop.f32.mrb[0].mxu0
    %795 = vmatprep.mubr.f32.mxu0 0.0
    %796 = vmatmul.mubr.f32.gmra.mrb[0].mxu0 %v679
    %v797 = vpop.f32.mrb[0].mxu0
    %v798 = vadd.f32 0.0, %v797
    %v799 = vpop.f32.mrb[0].mxu0
    %800 = vmatprep.mubr.f32.mxu0 0.0
    %801 = vmatmul.mubr.f32.gmra.mrb[0].mxu0 %v680
    %v802 = vpop.f32.mrb[0].mxu0
    %v803 = vadd.f32 0.0, %v802
    %v804 = vpop.f32.mrb[0].mxu0
    %805 = vmatprep.mubr.f32.mxu0 0.0
    %806 = vmatmul.mubr.f32.gmra.mrb[0].mxu0 %v681
    %v807 = vpop.f32.mrb[0].mxu0
    %v808 = vadd.f32 0.0, %v807
    %v809 = vpop.f32.mrb[0].mxu0
    %810 = vmatprep.mubr.f32.mxu0 0.0
    %811 = vmatmul.mubr.f32.gmra.mrb[0].mxu0 %v682
    %v812 = vpop.f32.mrb[0].mxu0
    %v813 = vadd.f32 0.0, %v812
    %v814 = vpop.f32.mrb[0].mxu0
    %815 = vmatprep.mubr.f32.mxu0 0.0
    %816 = vmatmul.mubr.f32.gmra.mrb[0].mxu0 %v683
    %v817 = vpop.f32.mrb[0].mxu0
    %v818 = vadd.f32 0.0, %v817
    %v819 = vpop.f32.mrb[0].mxu0
    %820 = vmatprep.mubr.f32.mxu0 0.0
    %821 = vmatmul.mubr.f32.gmra.mrb[0].mxu0 %v684
    %v822 = vpop.f32.mrb[0].mxu0
    %v823 = vadd.f32 0.0, %v822
    %v824 = vpop.f32.mrb[0].mxu0
    %825 = vmatprep.mubr.f32.mxu0 0.0
    %826 = vmatmul.mubr.f32.gmra.mrb[0].mxu0 %v685
    %v827 = vpop.f32.mrb[0].mxu0
    %v828 = vadd.f32 0.0, %v827
    %v829 = vpop.f32.mrb[0].mxu0
    %830 = vdwg.mxu0
    %831 = vxpose.xlu0.b32.start [1/16] %v220, 128
    %832 = vxpose.xlu0.b32.cont [2/16] %v221, 128
    %833 = vxpose.xlu0.b32.cont [3/16] %v222, 128
    %834 = vxpose.xlu0.b32.cont [4/16] %v223, 128
    %835 = vxpose.xlu0.b32.cont [5/16] %v224, 128
    %836 = vxpose.xlu0.b32.cont [6/16] %v225, 128
    %837 = vxpose.xlu0.b32.cont [7/16] %v226, 128
    %838 = vxpose.xlu0.b32.cont [8/16] %v227, 128
    %839 = vxpose.xlu0.b32.cont [9/16] %v228, 128
    %840 = vxpose.xlu0.b32.cont [10/16] %v229, 128
    %841 = vxpose.xlu0.b32.cont [11/16] %v230, 128
    %842 = vxpose.xlu0.b32.cont [12/16] %v231, 128
    %843 = vxpose.xlu0.b32.cont [13/16] %v232, 128
    %844 = vxpose.xlu0.b32.cont [14/16] %v233, 128
    %845 = vxpose.xlu0.b32.cont [15/16] %v234, 128
    %846 = vxpose.xlu0.b32.end [16/16] %v235, 128
    %v847 = vpop.trf.xlu0
    %v848 = vpop.trf.xlu0
    %v849 = vpop.trf.xlu0
    %v850 = vpop.trf.xlu0
    %v851 = vpop.trf.xlu0
    %v852 = vpop.trf.xlu0
    %v853 = vpop.trf.xlu0
    %v854 = vpop.trf.xlu0
    %v855 = vpop.trf.xlu0
    %v856 = vpop.trf.xlu0
    %v857 = vpop.trf.xlu0
    %v858 = vpop.trf.xlu0
    %v859 = vpop.trf.xlu0
    %v860 = vpop.trf.xlu0
    %v861 = vpop.trf.xlu0
    %v862 = vpop.trf.xlu0
    %863 = vmatprep.subr.mxu0 0.0
    %864 = vmatpush1.msra.mxu0 %v284
    %865 = vmatprep.subr.mxu0 0.0
    %866 = vmatpush1.msra.mxu0 %v285
    %867 = vmatprep.subr.mxu0 0.0
    %868 = vmatpush1.msra.mxu0 %v286
    %869 = vmatprep.subr.mxu0 0.0
    %870 = vmatpush1.msra.mxu0 %v287
    %871 = vmatprep.subr.mxu0 0.0
    %872 = vmatpush1.msra.mxu0 %v288
    %873 = vmatprep.subr.mxu0 0.0
    %874 = vmatpush1.msra.mxu0 %v289
    %875 = vmatprep.subr.mxu0 0.0
    %876 = vmatpush1.msra.mxu0 %v290
    %877 = vmatprep.subr.mxu0 0.0
    %878 = vmatpush1.msra.mxu0 %v291
    %879 = vmatprep.subr.mxu0 0.0
    %880 = vmatpush1.msra.mxu0 %v292
    %881 = vmatprep.subr.mxu0 0.0
    %882 = vmatpush1.msra.mxu0 %v293
    %883 = vmatprep.subr.mxu0 0.0
    %884 = vmatpush1.msra.mxu0 %v294
    %885 = vmatprep.subr.mxu0 0.0
    %886 = vmatpush1.msra.mxu0 %v295
    %887 = vmatprep.subr.mxu0 0.0
    %888 = vmatpush1.msra.mxu0 %v296
    %889 = vmatprep.subr.mxu0 0.0
    %890 = vmatpush1.msra.mxu0 %v297
    %891 = vmatprep.subr.mxu0 0.0
    %892 = vmatpush1.msra.mxu0 %v298
    %893 = vmatprep.subr.mxu0 0.0
    %894 = vmatpush1.msra.mxu0 %v299
    %895 = vmatprep.subr.mxu0 0.0
    %896 = vmatpush1.msra.mxu0 0.0
    %897 = vmatprep.subr.mxu0 0.0
    %898 = vmatpush1.msra.mxu0 0.0
    %899 = vmatprep.subr.mxu0 0.0
    %900 = vmatpush1.msra.mxu0 0.0
    %901 = vmatprep.subr.mxu0 0.0
    %902 = vmatpush1.msra.mxu0 0.0
    %903 = vmatprep.subr.mxu0 0.0
    %904 = vmatpush1.msra.mxu0 0.0
    %905 = vmatprep.subr.mxu0 0.0
    %906 = vmatpush1.msra.mxu0 0.0
    %907 = vmatprep.subr.mxu0 0.0
    %908 = vmatpush1.msra.mxu0 0.0
    %909 = vmatprep.subr.mxu0 0.0
    %910 = vmatpush1.msra.mxu0 0.0
    %911 = vmatprep.subr.mxu0 0.0
    %912 = vmatpush1.msra.mxu0 0.0
    %913 = vmatprep.subr.mxu0 0.0
    %914 = vmatpush1.msra.mxu0 0.0
    %915 = vmatprep.subr.mxu0 0.0
    %916 = vmatpush1.msra.mxu0 0.0
    %917 = vmatprep.subr.mxu0 0.0
    %918 = vmatpush1.msra.mxu0 0.0
    %919 = vmatprep.subr.mxu0 0.0
    %920 = vmatpush1.msra.mxu0 0.0
    %921 = vmatprep.subr.mxu0 0.0
    %922 = vmatpush1.msra.mxu0 0.0
    %923 = vmatprep.subr.mxu0 0.0
    %924 = vmatpush1.msra.mxu0 0.0
    %925 = vmatprep.subr.mxu0 0.0
    %926 = vmatpush1.msra.mxu0 0.0
    %927 = vmatprep.mubr.f32.mxu0 0.0
    %928 = vmatmul.mubr.f32.gmra.mrb[0].mxu0 %v847
    %v929 = vpop.f32.mrb[0].mxu0
    %v930 = vadd.f32 0.0, %v929
    %v931 = vpop.f32.mrb[0].mxu0
    %932 = vmatprep.mubr.f32.mxu0 0.0
    %933 = vmatmul.mubr.f32.gmra.mrb[0].mxu0 %v848
    %v934 = vpop.f32.mrb[0].mxu0
    %v935 = vadd.f32 0.0, %v934
    %v936 = vpop.f32.mrb[0].mxu0
    %937 = vmatprep.mubr.f32.mxu0 0.0
    %938 = vmatmul.mubr.f32.gmra.mrb[0].mxu0 %v849
    %v939 = vpop.f32.mrb[0].mxu0
    %v940 = vadd.f32 0.0, %v939
    %v941 = vpop.f32.mrb[0].mxu0
    %942 = vmatprep.mubr.f32.mxu0 0.0
    %943 = vmatmul.mubr.f32.gmra.mrb[0].mxu0 %v850
    %v944 = vpop.f32.mrb[0].mxu0
    %v945 = vadd.f32 0.0, %v944
    %v946 = vpop.f32.mrb[0].mxu0
    %947 = vmatprep.mubr.f32.mxu0 0.0
    %948 = vmatmul.mubr.f32.gmra.mrb[0].mxu0 %v851
    %v949 = vpop.f32.mrb[0].mxu0
    %v950 = vadd.f32 0.0, %v949
    %v951 = vpop.f32.mrb[0].mxu0
    %952 = vmatprep.mubr.f32.mxu0 0.0
    %953 = vmatmul.mubr.f32.gmra.mrb[0].mxu0 %v852
    %v954 = vpop.f32.mrb[0].mxu0
    %v955 = vadd.f32 0.0, %v954
    %v956 = vpop.f32.mrb[0].mxu0
    %957 = vmatprep.mubr.f32.mxu0 0.0
    %958 = vmatmul.mubr.f32.gmra.mrb[0].mxu0 %v853
    %v959 = vpop.f32.mrb[0].mxu0
    %v960 = vadd.f32 0.0, %v959
    %v961 = vpop.f32.mrb[0].mxu0
    %962 = vmatprep.mubr.f32.mxu0 0.0
    %963 = vmatmul.mubr.f32.gmra.mrb[0].mxu0 %v854
    %v964 = vpop.f32.mrb[0].mxu0
    %v965 = vadd.f32 0.0, %v964
    %v966 = vpop.f32.mrb[0].mxu0
    %967 = vmatprep.mubr.f32.mxu0 0.0
    %968 = vmatmul.mubr.f32.gmra.mrb[0].mxu0 %v855
    %v969 = vpop.f32.mrb[0].mxu0
    %v970 = vadd.f32 0.0, %v969
    %v971 = vpop.f32.mrb[0].mxu0
    %972 = vmatprep.mubr.f32.mxu0 0.0
    %973 = vmatmul.mubr.f32.gmra.mrb[0].mxu0 %v856
    %v974 = vpop.f32.mrb[0].mxu0
    %v975 = vadd.f32 0.0, %v974
    %v976 = vpop.f32.mrb[0].mxu0
    %977 = vmatprep.mubr.f32.mxu0 0.0
    %978 = vmatmul.mubr.f32.gmra.mrb[0].mxu0 %v857
    %v979 = vpop.f32.mrb[0].mxu0
    %v980 = vadd.f32 0.0, %v979
    %v981 = vpop.f32.mrb[0].mxu0
    %982 = vmatprep.mubr.f32.mxu0 0.0
    %983 = vmatmul.mubr.f32.gmra.mrb[0].mxu0 %v858
    %v984 = vpop.f32.mrb[0].mxu0
    %v985 = vadd.f32 0.0, %v984
    %v986 = vpop.f32.mrb[0].mxu0
    %987 = vmatprep.mubr.f32.mxu0 0.0
    %988 = vmatmul.mubr.f32.gmra.mrb[0].mxu0 %v859
    %v989 = vpop.f32.mrb[0].mxu0
    %v990 = vadd.f32 0.0, %v989
    %v991 = vpop.f32.mrb[0].mxu0
    %992 = vmatprep.mubr.f32.mxu0 0.0
    %993 = vmatmul.mubr.f32.gmra.mrb[0].mxu0 %v860
    %v994 = vpop.f32.mrb[0].mxu0
    %v995 = vadd.f32 0.0, %v994
    %v996 = vpop.f32.mrb[0].mxu0
    %997 = vmatprep.mubr.f32.mxu0 0.0
    %998 = vmatmul.mubr.f32.gmra.mrb[0].mxu0 %v861
    %v999 = vpop.f32.mrb[0].mxu0
    %v1000 = vadd.f32 0.0, %v999
    %v1001 = vpop.f32.mrb[0].mxu0
    %1002 = vmatprep.mubr.f32.mxu0 0.0
    %1003 = vmatmul.mubr.f32.gmra.mrb[0].mxu0 %v862
    %v1004 = vpop.f32.mrb[0].mxu0
    %v1005 = vadd.f32 0.0, %v1004
    %v1006 = vpop.f32.mrb[0].mxu0
    %1007 = vdwg.mxu0
    %v1008 = vadd.f32 %v108, %v399
    %v1009 = vadd.f32 %v109, %v404
    %v1010 = vadd.f32 %v110, %v409
    %v1011 = vadd.f32 %v111, %v414
    %v1012 = vadd.f32 %v112, %v419
    %v1013 = vadd.f32 %v113, %v424
    %v1014 = vadd.f32 %v114, %v429
    %v1015 = vadd.f32 %v115, %v434
    %v1016 = vadd.f32 %v116, %v439
    %v1017 = vadd.f32 %v117, %v444
    %v1018 = vadd.f32 %v118, %v449
    %v1019 = vadd.f32 %v119, %v454
    %v1020 = vadd.f32 %v120, %v459
    %v1021 = vadd.f32 %v121, %v464
    %v1022 = vadd.f32 %v122, %v469
    %v1023 = vadd.f32 %v123, %v474
    %v1024 = vadd.f32 %v124, %v576
    %v1025 = vadd.f32 %v125, %v581
    %v1026 = vadd.f32 %v126, %v586
    %v1027 = vadd.f32 %v127, %v591
    %v1028 = vadd.f32 %v128, %v596
    %v1029 = vadd.f32 %v129, %v601
    %v1030 = vadd.f32 %v130, %v606
    %v1031 = vadd.f32 %v131, %v611
    %v1032 = vadd.f32 %v132, %v616
    %v1033 = vadd.f32 %v133, %v621
    %v1034 = vadd.f32 %v134, %v626
    %v1035 = vadd.f32 %v135, %v631
    %v1036 = vadd.f32 %v136, %v636
    %v1037 = vadd.f32 %v137, %v641
    %v1038 = vadd.f32 %v138, %v646
    %v1039 = vadd.f32 %v139, %v651
    %v1040 = vadd.f32 %v140, %v753
    %v1041 = vadd.f32 %v141, %v758
    %v1042 = vadd.f32 %v142, %v763
    %v1043 = vadd.f32 %v143, %v768
    %v1044 = vadd.f32 %v144, %v773
    %v1045 = vadd.f32 %v145, %v778
    %v1046 = vadd.f32 %v146, %v783
    %v1047 = vadd.f32 %v147, %v788
    %v1048 = vadd.f32 %v148, %v793
    %v1049 = vadd.f32 %v149, %v798
    %v1050 = vadd.f32 %v150, %v803
    %v1051 = vadd.f32 %v151, %v808
    %v1052 = vadd.f32 %v152, %v813
    %v1053 = vadd.f32 %v153, %v818
    %v1054 = vadd.f32 %v154, %v823
    %v1055 = vadd.f32 %v155, %v828
    %v1056 = vadd.f32 %v156, %v930
    %v1057 = vadd.f32 %v157, %v935
    %v1058 = vadd.f32 %v158, %v940
    %v1059 = vadd.f32 %v159, %v945
    %v1060 = vadd.f32 %v160, %v950
    %v1061 = vadd.f32 %v161, %v955
    %v1062 = vadd.f32 %v162, %v960
    %v1063 = vadd.f32 %v163, %v965
    %v1064 = vadd.f32 %v164, %v970
    %v1065 = vadd.f32 %v165, %v975
    %v1066 = vadd.f32 %v166, %v980
    %v1067 = vadd.f32 %v167, %v985
    %v1068 = vadd.f32 %v168, %v990
    %v1069 = vadd.f32 %v169, %v995
    %v1070 = vadd.f32 %v170, %v1000
    %v1071 = vadd.f32 %v171, %v1005
    %1072 = vst [vmem:[#allocation7] sm:$0xff] %v1008
    %1073 = vst [vmem:[#allocation7 + $0x8] sm:$0xff] %v1009
    %1074 = vst [vmem:[#allocation7 + $0x10] sm:$0xff] %v1010
    %1075 = vst [vmem:[#allocation7 + $0x18] sm:$0xff] %v1011
    %1076 = vst [vmem:[#allocation7 + $0x20] sm:$0xff] %v1012
    %1077 = vst [vmem:[#allocation7 + $0x28] sm:$0xff] %v1013
    %1078 = vst [vmem:[#allocation7 + $0x30] sm:$0xff] %v1014
    %1079 = vst [vmem:[#allocation7 + $0x38] sm:$0xff] %v1015
    %1080 = vst [vmem:[#allocation7 + $0x40] sm:$0xff] %v1016
    %1081 = vst [vmem:[#allocation7 + $0x48] sm:$0xff] %v1017
    %1082 = vst [vmem:[#allocation7 + $0x50] sm:$0xff] %v1018
    %1083 = vst [vmem:[#allocation7 + $0x58] sm:$0xff] %v1019
    %1084 = vst [vmem:[#allocation7 + $0x60] sm:$0xff] %v1020
    %1085 = vst [vmem:[#allocation7 + $0x68] sm:$0xff] %v1021
    %1086 = vst [vmem:[#allocation7 + $0x70] sm:$0xff] %v1022
    %1087 = vst [vmem:[#allocation7 + $0x78] sm:$0xff] %v1023
    %1088 = vst [vmem:[#allocation7 + $0x80] sm:$0xff] %v1024
    %1089 = vst [vmem:[#allocation7 + $0x88] sm:$0xff] %v1025
    %1090 = vst [vmem:[#allocation7 + $0x90] sm:$0xff] %v1026
    %1091 = vst [vmem:[#allocation7 + $0x98] sm:$0xff] %v1027
    %1092 = vst [vmem:[#allocation7 + $0xa0] sm:$0xff] %v1028
    %1093 = vst [vmem:[#allocation7 + $0xa8] sm:$0xff] %v1029
    %1094 = vst [vmem:[#allocation7 + $0xb0] sm:$0xff] %v1030
    %1095 = vst [vmem:[#allocation7 + $0xb8] sm:$0xff] %v1031
    %1096 = vst [vmem:[#allocation7 + $0xc0] sm:$0xff] %v1032
    %1097 = vst [vmem:[#allocation7 + $0xc8] sm:$0xff] %v1033
    %1098 = vst [vmem:[#allocation7 + $0xd0] sm:$0xff] %v1034
    %1099 = vst [vmem:[#allocation7 + $0xd8] sm:$0xff] %v1035
    %1100 = vst [vmem:[#allocation7 + $0xe0] sm:$0xff] %v1036
    %1101 = vst [vmem:[#allocation7 + $0xe8] sm:$0xff] %v1037
    %1102 = vst [vmem:[#allocation7 + $0xf0] sm:$0xff] %v1038
    %1103 = vst [vmem:[#allocation7 + $0xf8] sm:$0xff] %v1039
    %1104 = vst [vmem:[#allocation7 + $0x100] sm:$0xff] %v1040
    %1105 = vst [vmem:[#allocation7 + $0x108] sm:$0xff] %v1041
    %1106 = vst [vmem:[#allocation7 + $0x110] sm:$0xff] %v1042
    %1107 = vst [vmem:[#allocation7 + $0x118] sm:$0xff] %v1043
    %1108 = vst [vmem:[#allocation7 + $0x120] sm:$0xff] %v1044
    %1109 = vst [vmem:[#allocation7 + $0x128] sm:$0xff] %v1045
    %1110 = vst [vmem:[#allocation7 + $0x130] sm:$0xff] %v1046
    %1111 = vst [vmem:[#allocation7 + $0x138] sm:$0xff] %v1047
    %1112 = vst [vmem:[#allocation7 + $0x140] sm:$0xff] %v1048
    %1113 = vst [vmem:[#allocation7 + $0x148] sm:$0xff] %v1049
    %1114 = vst [vmem:[#allocation7 + $0x150] sm:$0xff] %v1050
    %1115 = vst [vmem:[#allocation7 + $0x158] sm:$0xff] %v1051
    %1116 = vst [vmem:[#allocation7 + $0x160] sm:$0xff] %v1052
    %1117 = vst [vmem:[#allocation7 + $0x168] sm:$0xff] %v1053
    %1118 = vst [vmem:[#allocation7 + $0x170] sm:$0xff] %v1054
    %1119 = vst [vmem:[#allocation7 + $0x178] sm:$0xff] %v1055
    %1120 = vst [vmem:[#allocation7 + $0x180] sm:$0xff] %v1056
    %1121 = vst [vmem:[#allocation7 + $0x188] sm:$0xff] %v1057
    %1122 = vst [vmem:[#allocation7 + $0x190] sm:$0xff] %v1058
    %1123 = vst [vmem:[#allocation7 + $0x198] sm:$0xff] %v1059
    %1124 = vst [vmem:[#allocation7 + $0x1a0] sm:$0xff] %v1060
    %1125 = vst [vmem:[#allocation7 + $0x1a8] sm:$0xff] %v1061
    %1126 = vst [vmem:[#allocation7 + $0x1b0] sm:$0xff] %v1062
    %1127 = vst [vmem:[#allocation7 + $0x1b8] sm:$0xff] %v1063
    %1128 = vst [vmem:[#allocation7 + $0x1c0] sm:$0xff] %v1064
    %1129 = vst [vmem:[#allocation7 + $0x1c8] sm:$0xff] %v1065
    %1130 = vst [vmem:[#allocation7 + $0x1d0] sm:$0xff] %v1066
    %1131 = vst [vmem:[#allocation7 + $0x1d8] sm:$0xff] %v1067
    %1132 = vst [vmem:[#allocation7 + $0x1e0] sm:$0xff] %v1068
    %1133 = vst [vmem:[#allocation7 + $0x1e8] sm:$0xff] %v1069
    %1134 = vst [vmem:[#allocation7 + $0x1f0] sm:$0xff] %v1070
    %1135 = vst [vmem:[#allocation7 + $0x1f8] sm:$0xff] %v1071
    // Predicated region
    $region22: #{tpu_custom_call.1} parent=1 // pred_check
      _
    $region23: #{tpu_custom_call.1} parent=1 // pred_check_branch
      %1137 = sbr.rel (0) target = $region25
    $region24: #{tpu_custom_call.1} parent=1 // pred_region
      %s1139 = ssub.s32 8192, 8192
      %1140 = vsyncadd [#allocation4], %s1139
      %s1141 = sshll.u32 [#allocation7], 4
      %s1142 = int_to_ptr.vmem [resolvable:$true] %s1141
      %1147 = dma.vmem_to_hbm [thread:$0]  %s1142, 8192, %s2, [#allocation4], 128, 128, 8
    $region25: #{tpu_custom_call.1} parent=1 // pred_fallthru
      _
    // Predicated region
    $region26: #{tpu_custom_call.1} parent=1 // pred_check
      _
    $region27: #{tpu_custom_call.1} parent=1 // pred_check_branch
      %1149 = sbr.rel (0) target = $region29
    $region28: #{tpu_custom_call.1} parent=1 // pred_region
      %1150 = dma.done [#allocation4], 8192
    $region29: #{tpu_custom_call.1} parent=1 // pred_fallthru
      _
    %1151 = vsyncpa [#allocation3], 1
    %1152 = vsyncpa [#allocation6], 1
    %1153 = vsyncpa [#allocation4], 1

</llo_original>
